<compile_context>
chip_gen: v7x
topology: tpu7x:2x2x1
jax: 0.10.0
libtpu: 0.0.40
codegen_flags: <defaults>
</compile_context>

<pallas_src>
import jax
import jax.numpy as jnp
from jax import lax
from jax.experimental import pallas as pl
from jax.experimental.pallas import tpu as pltpu

CLAMP_MIN = 0.6327
CLAMP_MAX = 0.7688

C_IN = 1
C_OUT = 62
KSIZE = 9
STRIDE = 4

K = C_IN * KSIZE * KSIZE      # 81 patch rows (contraction dim)
K_PAD = 96                    # round_up(81, 16): bf16-tile aligned, zeros are real
TS_MAX = 2048                 # spatial (lane) tile


def _conv_clamp_kernel(p_ref, w_ref, b_ref, o_ref):
    # p_ref: (1, K_PAD, TS)  bf16 patch block (K on sublanes, spatial on lanes)
    # w_ref: (C_OUT, K_PAD)  bf16 packed weight (resident across the whole grid)
    # b_ref: (C_OUT, 1)      f32 bias (resident)
    # o_ref: (1, C_OUT, TS)  f32 output block -> already NCHW after wrapper reshape
    acc = jnp.dot(w_ref[...], p_ref[0], preferred_element_type=jnp.float32)
    acc = acc + b_ref[...]                       # lane-broadcast bias add (f32)
    acc = jnp.maximum(acc, CLAMP_MIN)            # clamp_min
    acc = jnp.minimum(acc, CLAMP_MAX)            # clamp_max
    o_ref[0] = acc


def pack_params(weight, bias):
    """One-time packing of Conv2d params + patch-extraction kernel (off hot path)."""
    # (62, 81) weight matrix, zero-padded on K to 96, in bf16 for the MXU.
    w_mat = weight.reshape(C_OUT, K).astype(jnp.float32)
    w_packed = jnp.pad(w_mat, ((0, 0), (0, K_PAD - K))).astype(jnp.bfloat16)
    b_packed = bias.astype(jnp.float32).reshape(C_OUT, 1)
    # Identity im2col kernel with K_PAD output channels: channel o = input pixel
    # at (kh, kw) with o = kh*KSIZE + kw for o < 81, channels 81..95 are zeros.
    # This makes the XLA conv emit the K-padded patch slab directly (no pad pass),
    # and the gather is bit-exact in bf16 (multiply by 1.0 / 0.0 only).
    eye = jnp.eye(K, dtype=jnp.bfloat16)                       # (81, 81)
    patch_kernel = jnp.pad(eye, ((0, K_PAD - K), (0, 0)))      # (96, 81)
    patch_kernel = patch_kernel.reshape(K_PAD, C_IN, KSIZE, KSIZE)
    return patch_kernel, w_packed, b_packed


@jax.jit
def conv_clamp(x, patch_kernel, w_packed, b_packed):
    """x: (N, 1, H, W) f32 -> (N, 62, OH, OW) f32."""
    n, c_in, h, w = x.shape
    assert c_in == C_IN
    oh = (h - KSIZE) // STRIDE + 1
    ow = (w - KSIZE) // STRIDE + 1
    s = oh * ow

    # im2col in a single fused XLA op, emitted directly in (N, K_PAD, OH, OW)
    # bf16 layout (free reshape to (N, K_PAD, S)); rows 81..95 are real zeros so
    # the in-kernel contraction over K_PAD is exact.
    pt = lax.conv_general_dilated(
        x.astype(jnp.bfloat16), patch_kernel,
        window_strides=(STRIDE, STRIDE), padding="VALID",
        dimension_numbers=("NCHW", "OIHW", "NCHW"))            # (N, K_PAD, OH, OW)
    pt = pt.reshape(n, K_PAD, s)

    # Lane-dense spatial tiling; boundary tiles are masked by Pallas, so no
    # padding of the patch array and no post-call slice of the output.
    ts = min(TS_MAX, s)              # ts == full dim when s < TS_MAX (legal)
    grid = (n, pl.cdiv(s, ts))

    out = pl.pallas_call(
        _conv_clamp_kernel,
        out_shape=jax.ShapeDtypeStruct((n, C_OUT, s), jnp.float32),
        grid_spec=pltpu.PrefetchScalarGridSpec(
            num_scalar_prefetch=0,
            grid=grid,
            in_specs=[
                pl.BlockSpec((1, K_PAD, ts), lambda b, j: (b, 0, j)),
                pl.BlockSpec((C_OUT, K_PAD), lambda b, j: (0, 0)),   # resident
                pl.BlockSpec((C_OUT, 1), lambda b, j: (0, 0)),       # resident
            ],
            out_specs=pl.BlockSpec((1, C_OUT, ts), lambda b, j: (b, 0, j)),
        ),
        compiler_params=pltpu.CompilerParams(
            dimension_semantics=("parallel", "parallel")),
    )(pt, w_packed, b_packed)

    # (N, C_OUT, S) -> (N, C_OUT, OH, OW): contiguous reshape, no copy, no slice.
    return out.reshape(n, C_OUT, oh, ow)


if __name__ == "__main__":
    key = jax.random.PRNGKey(0)
    kx, kw, kb = jax.random.split(key, 3)

    # Small shapes consistent with the module: N=2, C_in=1, H=W=33
    # -> conv output (2, 62, 7, 7).
    x = jax.random.normal(kx, (2, C_IN, 33, 33), dtype=jnp.float32)

    # Deterministic parameter init (Conv2d-like uniform fan-in scaling).
    fan_in = C_IN * KSIZE * KSIZE
    bound = 1.0 / (fan_in ** 0.5)
    weight = jax.random.uniform(kw, (C_OUT, C_IN, KSIZE, KSIZE),
                                minval=-bound, maxval=bound, dtype=jnp.float32)
    bias = jax.random.uniform(kb, (C_OUT,), minval=-bound, maxval=bound,
                              dtype=jnp.float32)

    # Pack params once (off the hot path), then run the fused conv+clamp.
    patch_kernel, w_packed, b_packed = pack_params(weight, bias)
    out = conv_clamp(x, patch_kernel, w_packed, b_packed)
    out = jax.block_until_ready(out)

    # Sanity: f32 reference conv + clamp in plain JAX.
    ref = lax.conv_general_dilated(
        x, weight, window_strides=(STRIDE, STRIDE), padding="VALID",
        dimension_numbers=("NCHW", "OIHW", "NCHW"),
        precision=lax.Precision.HIGHEST)
    ref = jnp.clip(ref + bias[None, :, None, None], CLAMP_MIN, CLAMP_MAX)

    assert out.shape == (2, C_OUT, 7, 7), out.shape
    assert bool(jnp.all(out >= CLAMP_MIN - 1e-6)), "clamp_min violated"
    assert bool(jnp.all(out <= CLAMP_MAX + 1e-6)), "clamp_max violated"
    # bf16 matmul operands (f32 accumulate) => relaxed tolerance vs f32 reference.
    max_err = float(jnp.max(jnp.abs(out - ref)))
    assert bool(jnp.allclose(out, ref, atol=1e-2, rtol=1e-2)), max_err

    print("KERNEL_OK")
</pallas_src>

<mosaic_0001>
module attributes {stable_mosaic.version = 11 : i64} {
  func.func @_conv_clamp_kernel(%arg0: i32, %arg1: i32, %arg2: memref<1x96x49xbf16, #tpu.memory_space<vmem>>, %arg3: memref<62x96xbf16, #tpu.memory_space<vmem>>, %arg4: memref<62x1xf32, #tpu.memory_space<vmem>>, %arg5: memref<1x62x49xf32, #tpu.memory_space<vmem>>) attributes {dimension_semantics = [#tpu.dimension_semantics<parallel>, #tpu.dimension_semantics<parallel>], iteration_bounds = array<i64: 2, 1>, scalar_prefetch = 0 : i64, scratch_operands = 0 : i64, tpu.core_type = #tpu.core_type<tc>, window_params = [{transform_indices = @transform_0, window_bounds = array<i64: 1, 96, 49>}, {pipeline_mode = #tpu.pipeline_mode<synchronous>, transform_indices = @transform_1, window_bounds = array<i64: 62, 96>}, {pipeline_mode = #tpu.pipeline_mode<synchronous>, transform_indices = @transform_2, window_bounds = array<i64: 62, 1>}, {transform_indices = @transform_3, window_bounds = array<i64: 1, 62, 49>}]} {
    %c0 = arith.constant 0 : index
    %c0_0 = arith.constant 0 : index
    %0 = vector.load %arg3[%c0, %c0_0] : memref<62x96xbf16, #tpu.memory_space<vmem>>, vector<62x96xbf16>
    %c0_1 = arith.constant 0 : index
    %c0_2 = arith.constant 0 : index
    %c0_3 = arith.constant 0 : index
    %1 = vector.load %arg2[%c0_1, %c0_2, %c0_3] : memref<1x96x49xbf16, #tpu.memory_space<vmem>>, vector<1x96x49xbf16>
    %2 = vector.shape_cast %1 : vector<1x96x49xbf16> to vector<96x49xbf16>
    %cst = arith.constant dense<0.000000e+00> : vector<62x49xf32>
    %3 = tpu.matmul %0, %2, %cst {dimension_numbers = #tpu.dot_dimension_numbers<[1], [0], [0], [1], [0, 0, 1, 1], [], []>} : vector<62x96xbf16>, vector<96x49xbf16>, vector<62x49xf32> -> vector<62x49xf32>
    %c0_4 = arith.constant 0 : index
    %c0_5 = arith.constant 0 : index
    %4 = vector.load %arg4[%c0_4, %c0_5] : memref<62x1xf32, #tpu.memory_space<vmem>>, vector<62x1xf32>
    %5 = vector.broadcast %4 : vector<62x1xf32> to vector<62x49xf32>
    %6 = arith.addf %3, %5 : vector<62x49xf32>
    %cst_6 = arith.constant 6.327000e-01 : f32
    %7 = vector.broadcast %cst_6 : f32 to vector<62x49xf32>
    %8 = arith.maximumf %6, %7 : vector<62x49xf32>
    %cst_7 = arith.constant 7.688000e-01 : f32
    %9 = vector.broadcast %cst_7 : f32 to vector<62x49xf32>
    %10 = arith.minimumf %8, %9 : vector<62x49xf32>
    %c0_8 = arith.constant 0 : index
    %c0_9 = arith.constant 0 : index
    %c0_10 = arith.constant 0 : index
    %11 = vector.load %arg5[%c0_8, %c0_9, %c0_10] : memref<1x62x49xf32, #tpu.memory_space<vmem>>, vector<1x62x49xf32>
    %12 = vector.shape_cast %11 : vector<1x62x49xf32> to vector<62x49xf32>
    %13 = vector.shape_cast %10 : vector<62x49xf32> to vector<1x62x49xf32>
    tpu.vector_store %arg5[%c0_8, %c0_9, %c0_10], %13 {strides = array<i32>} : memref<1x62x49xf32, #tpu.memory_space<vmem>>, vector<1x62x49xf32>,
    return
  }
  func.func @transform_0(%arg0: i32, %arg1: i32) -> (i32, i32, i32) {
    %c0_i32 = arith.constant 0 : i32
    %c0_i32_0 = arith.constant 0 : i32
    return %arg0, %c0_i32, %arg1 : i32, i32, i32
  }
  func.func @transform_1(%arg0: i32, %arg1: i32) -> (i32, i32) {
    %c0_i32 = arith.constant 0 : i32
    %c0_i32_0 = arith.constant 0 : i32
    %c0_i32_1 = arith.constant 0 : i32
    return %c0_i32, %c0_i32_0 : i32, i32
  }
  func.func @transform_2(%arg0: i32, %arg1: i32) -> (i32, i32) {
    %c0_i32 = arith.constant 0 : i32
    %c0_i32_0 = arith.constant 0 : i32
    %c0_i32_1 = arith.constant 0 : i32
    return %c0_i32, %c0_i32_0 : i32, i32
  }
  func.func @transform_3(%arg0: i32, %arg1: i32) -> (i32, i32, i32) {
    %c0_i32 = arith.constant 0 : i32
    %c0_i32_0 = arith.constant 0 : i32
    return %arg0, %c0_i32, %arg1 : i32, i32, i32
  }
}

</mosaic_0001>

<llo_original>
// kernel: conv_clamp.1
$region0: #{conv_clamp.1}
  #allocation0 [shape = 'u32[]', space=smem, size = 0x4, offset = 0x4, fixed_abs, tag = 'smem constant byte address 0x4 - core index']
  #allocation1 [shape = 'u32[144,128]{1,0:T(1,128)}', space=vmem, size = 0x12000, scoped, tag = 'internal scratch']
  %s0 = inlined_call_operand.vmem [shape: bf16[2,96,49], index: 0, kind: input, shape index: {}]
  %s1 = inlined_call_operand.vmem [shape: bf16[62,96], index: 1, kind: input, shape index: {}]
  %s2 = inlined_call_operand.vmem [shape: f32[62,1], index: 2, kind: input, shape index: {}]
  %s3 = inlined_call_operand.vmem [shape: f32[2,62,49], index: 3, kind: output, shape index: {}]
  %s4 = sld [smem:[#allocation0]]
  $region45: #{conv_clamp.1} parent=0
    _
  %s6 = ssub.s32 1, %s4
  %s7 = scalar_select 0, %s6, %s4
  loop: start=0, step=1, limit=4
  $region2: #{conv_clamp.1} parent=0 // loop_pre_header
    _
  $region3: #{conv_clamp.1} parent=0 // loop_header
    %s9 = sphi 0, %s13
    %p10 = scmp.ge.s32.totalorder %s9, 4
    %s16 = sphi 0, %s28
    %s17 = sphi 0, %s24
    %s18 = sphi 0, %s16
    %s19 = sphi 0, %s17
    %s20 = sphi 0, %s18
    %s21 = sphi 0, %s19
    %s33 = sphi 0, %s35
    %s36 = sphi 0, %s33
    %s37 = sphi 0, %s36
    %s53 = sphi 0, %s37
    %s57 = sphi 0, %s57
    %s59 = sphi 0, %s57
    %s60 = sphi 0, %s59
    %s74 = sphi 0, %s60
    %s78 = sphi 0, %s78
    %s80 = sphi 0, %s78
    %s81 = sphi 0, %s80
    %s95 = sphi 0, %s81
    %s103 = sphi 0, %s105
    %s106 = sphi 0, %s103
    %s107 = sphi 0, %s106
    %s123 = sphi 0, %s107
  $region4: #{conv_clamp.1} parent=0 // loop_header_branch
    %12 = sbr.rel (%p10) target = $region8
  $region5: #{conv_clamp.1} parent=0 // loop_body
    %s14 = ssub.s32 %s9, 1
    %s15 = ssub.s32 %s9, 2
    %s22 = sadd.s32 1, %s17
    %p23 = scmp.ge.s32.totalorder %s22, 1
    %s24 = scalar_select %p23, 0, %s22
    %s25 = sadd.s32 1, %s16
    %s26 = scalar_select %p23, %s25, %s16
    %p27 = scmp.ge.s32.totalorder %s26, 2
    %s28 = scalar_select %p27, 0, %s26
    %s29 = ssub.s32 %s16, %s28
    %s30 = ssub.s32 %s17, %s24
    %s31 = sor.u32 %s29, %s30
    %p32 = scmp.eq.s32.totalorder %s31, 0
    %s34 = sadd.s32 %s33, 1
    %s35 = scalar_select %p32, %s33, %s34
    %p38 = pneg %p32
    %p39 = scmp.eq.s32.totalorder %s9, 1
    %p40 = por %p38, %p39
    %p41 = scmp.ne.s32.totalorder %s33, %s36
    %p42 = scmp.eq.s32.totalorder %s9, 0
    %p43 = por %p41, %p42
    %p44 = scmp.ne.s32.totalorder %s33, %s36
    %p45 = scmp.eq.s32.totalorder %s14, 1
    %p46 = por %p44, %p45
    %p47 = scmp.ne.s32.totalorder %s36, %s37
    %p48 = scmp.eq.s32.totalorder %s14, 0
    %p49 = por %p47, %p48
    %p50 = scmp.ne.s32.totalorder %s36, %s37
    %p51 = scmp.eq.s32.totalorder %s15, 1
    %p52 = por %p50, %p51
    %p54 = scmp.ne.s32.totalorder %s37, %s53
    %p55 = scmp.eq.s32.totalorder %s15, 0
    %p56 = por %p54, %p55
    %s58 = sadd.s32 %s57, 1
    %p61 = scmp.eq.s32.totalorder %s9, 1
    %p62 = scmp.ne.s32.totalorder %s57, %s59
    %p63 = scmp.eq.s32.totalorder %s9, 0
    %p64 = por %p62, %p63
    %p65 = scmp.ne.s32.totalorder %s57, %s59
    %p66 = scmp.eq.s32.totalorder %s14, 1
    %p67 = por %p65, %p66
    %p68 = scmp.ne.s32.totalorder %s59, %s60
    %p69 = scmp.eq.s32.totalorder %s14, 0
    %p70 = por %p68, %p69
    %p71 = scmp.ne.s32.totalorder %s59, %s60
    %p72 = scmp.eq.s32.totalorder %s15, 1
    %p73 = por %p71, %p72
    %p75 = scmp.ne.s32.totalorder %s60, %s74
    %p76 = scmp.eq.s32.totalorder %s15, 0
    %p77 = por %p75, %p76
    %s79 = sadd.s32 %s78, 1
    %p82 = scmp.eq.s32.totalorder %s9, 1
    %p83 = scmp.ne.s32.totalorder %s78, %s80
    %p84 = scmp.eq.s32.totalorder %s9, 0
    %p85 = por %p83, %p84
    %p86 = scmp.ne.s32.totalorder %s78, %s80
    %p87 = scmp.eq.s32.totalorder %s14, 1
    %p88 = por %p86, %p87
    %p89 = scmp.ne.s32.totalorder %s80, %s81
    %p90 = scmp.eq.s32.totalorder %s14, 0
    %p91 = por %p89, %p90
    %p92 = scmp.ne.s32.totalorder %s80, %s81
    %p93 = scmp.eq.s32.totalorder %s15, 1
    %p94 = por %p92, %p93
    %p96 = scmp.ne.s32.totalorder %s81, %s95
    %p97 = scmp.eq.s32.totalorder %s15, 0
    %p98 = por %p96, %p97
    %s99 = ssub.s32 %s16, %s28
    %s100 = ssub.s32 %s17, %s24
    %s101 = sor.u32 %s99, %s100
    %p102 = scmp.eq.s32.totalorder %s101, 0
    %s104 = sadd.s32 %s103, 1
    %s105 = scalar_select %p102, %s103, %s104
    %p108 = pneg %p102
    %p109 = scmp.eq.s32.totalorder %s9, 1
    %p110 = por %p108, %p109
    %p111 = scmp.ne.s32.totalorder %s103, %s106
    %p112 = scmp.eq.s32.totalorder %s9, 0
    %p113 = por %p111, %p112
    %p114 = scmp.ne.s32.totalorder %s103, %s106
    %p115 = scmp.eq.s32.totalorder %s14, 1
    %p116 = por %p114, %p115
    %p117 = scmp.ne.s32.totalorder %s106, %s107
    %p118 = scmp.eq.s32.totalorder %s14, 0
    %p119 = por %p117, %p118
    %p120 = scmp.ne.s32.totalorder %s106, %s107
    %p121 = scmp.eq.s32.totalorder %s15, 1
    %p122 = por %p120, %p121
    %p124 = scmp.ne.s32.totalorder %s107, %s123
    %p125 = scmp.eq.s32.totalorder %s15, 0
    %p126 = por %p124, %p125
    %p127 = scmp.le.s32.totalorder 1, %s9
    %p128 = scmp.lt.s32.totalorder %s9, 3
    %p129 = pnand %p127, %p128
    %p130 = pneg %p129
    // Predicated region
    $region9: #{conv_clamp.1} parent=5 // pred_check
      _
    $region10: #{conv_clamp.1} parent=5 // pred_check_branch
      %132 = sbr.rel (%p129) target = $region12
    $region11: #{conv_clamp.1} parent=5 // pred_region
      %s133 = ssub.s32 %s9, 1
      // Predicated region
      $region13: #{conv_clamp.1} parent=11 // pred_check
        %p134 = pneg %p70
      $region14: #{conv_clamp.1} parent=11 // pred_check_branch
        %136 = sbr.rel (%p134) target = $region16
      $region15: #{conv_clamp.1} parent=11 // pred_region
        _
      $region16: #{conv_clamp.1} parent=11 // pred_fallthru
        _
      // Predicated region
      $region17: #{conv_clamp.1} parent=11 // pred_check
        %p137 = pneg %p91
      $region18: #{conv_clamp.1} parent=11 // pred_check_branch
        %139 = sbr.rel (%p137) target = $region20
      $region19: #{conv_clamp.1} parent=11 // pred_region
        _
      $region20: #{conv_clamp.1} parent=11 // pred_fallthru
        _
    $region12: #{conv_clamp.1} parent=5 // pred_fallthru
      _
    %p140 = scmp.lt.s32.totalorder %s9, 2
    // Predicated region
    $region21: #{conv_clamp.1} parent=5 // pred_check
      %p141 = pneg %p140
    $region22: #{conv_clamp.1} parent=5 // pred_check_branch
      %143 = sbr.rel (%p141) target = $region24
    $region23: #{conv_clamp.1} parent=5 // pred_region
      // Predicated region
      $region25: #{conv_clamp.1} parent=23 // pred_check
        %p144 = pneg %p43
      $region26: #{conv_clamp.1} parent=23 // pred_check_branch
        %146 = sbr.rel (%p144) target = $region28
      $region27: #{conv_clamp.1} parent=23 // pred_region
        %p147 = scmp.lt.s32.totalorder %s16, 1
        %s148 = scalar_select %p147, %s16, 1
        %p149 = scmp.lt.s32.totalorder %s17, 0
        %s150 = scalar_select %p149, %s17, 0
        %s151 = smul.addr %s148, 12
        %s152 = sadd.s32 %s150, %s151
        %s153 = smul.addr %s152, 4
        %s154 = scalar_lea.vmem %s0, %s153
      $region28: #{conv_clamp.1} parent=23 // pred_fallthru
        _
    $region24: #{conv_clamp.1} parent=5 // pred_fallthru
      _
    %p155 = scmp.le.s32.totalorder 1, %s9
    %p156 = scmp.lt.s32.totalorder %s9, 3
    %p157 = pnand %p155, %p156
    %p158 = pneg %p157
    // Predicated region
    $region29: #{conv_clamp.1} parent=5 // pred_check
      _
    $region30: #{conv_clamp.1} parent=5 // pred_check_branch
      %160 = sbr.rel (%p157) target = $region32
    $region31: #{conv_clamp.1} parent=5 // pred_region
      %s161 = ssub.s32 %s9, 1
      %p162 = scmp.lt.s32.totalorder %s18, 1
      %s163 = scalar_select %p162, %s18, 1
      %p164 = scmp.lt.s32.totalorder %s19, 0
      %s165 = scalar_select %p164, %s19, 0
      %s166 = smul.addr %s163, 12
      %s167 = sadd.s32 %s165, %s166
      %s168 = smul.addr %s167, 4
      %s169 = scalar_lea.vmem %s0, %s168
      %p170 = pneg %p49
      %p171 = pneg %p46
      %p172 = pneg %p70
      %p173 = pneg %p67
      %p174 = pneg %p91
      %p175 = pneg %p88
      %p176 = pneg %p119
      %p177 = pneg %p116
      %p178 = scmp.lt.s32.totalorder %s18, 1
      %s179 = scalar_select %p178, %s18, 1
      %p180 = scmp.lt.s32.totalorder %s19, 0
      %s181 = scalar_select %p180, %s19, 0
      %s182 = smul.addr %s179, 8
      %s183 = sadd.s32 %s181, %s182
      %s184 = smul.addr %s183, 8
      %s185 = scalar_lea.vmem %s3, %s184
      %p186 = scmp.lt.s32.totalorder %s18, 1
      %s187 = scalar_select %p186, %s18, 1
      %p188 = scmp.lt.s32.totalorder %s19, 0
      %s189 = scalar_select %p188, %s19, 0
      %s190 = smul.addr %s187, 12
      %s191 = sadd.s32 %s189, %s190
      %s192 = smul.addr %s191, 4
      %s193 = scalar_lea.vmem %s0, %s192
      %p194 = scmp.lt.s32.totalorder %s18, 1
      %s195 = scalar_select %p194, %s18, 1
      %p196 = scmp.lt.s32.totalorder %s19, 0
      %s197 = scalar_select %p196, %s19, 0
      %s198 = smul.addr %s195, 8
      %s199 = sadd.s32 %s197, %s198
      %s200 = smul.addr %s199, 8
      %s201 = scalar_lea.vmem %s3, %s200
      %v203 = vld [vmem:[%s1] sm:$0xf]
      %v204 = vld [vmem:[%s1 + $0x4] sm:$0xf]
      %v205 = vld [vmem:[%s1 + $0x8] sm:$0xf]
      %v206 = vld [vmem:[%s1 + $0xc] sm:$0xf]
      %v207 = vld [vmem:[%s1 + $0x10] sm:$0xf]
      %v208 = vld [vmem:[%s1 + $0x14] sm:$0xf]
      %v209 = vld [vmem:[%s1 + $0x18] sm:$0xf]
      %v210 = vld [vmem:[%s1 + $0x1c] sm:$0x7]
      %v211 = vld [vmem:[%s193] sm:$0xf]
      %v212 = vld [vmem:[%s193 + $0x4] sm:$0xf]
      %v213 = vld [vmem:[%s193 + $0x8] sm:$0xf]
      %v214 = vld [vmem:[%s193 + $0xc] sm:$0xf]
      %v215 = vld [vmem:[%s193 + $0x10] sm:$0xf]
      %v216 = vld [vmem:[%s193 + $0x14] sm:$0xf]
      %v217 = vld [vmem:[%s193 + $0x18] sm:$0xf]
      %v218 = vld [vmem:[%s193 + $0x1c] sm:$0xf]
      %v219 = vld [vmem:[%s193 + $0x20] sm:$0xf]
      %v220 = vld [vmem:[%s193 + $0x24] sm:$0xf]
      %v221 = vld [vmem:[%s193 + $0x28] sm:$0xf]
      %v222 = vld [vmem:[%s193 + $0x2c] sm:$0xf]
      %v223 = vld [vmem:[%s2] sm:$0xff]
      %v224 = vld [vmem:[%s2 + $0x8] sm:$0xff]
      %v225 = vld [vmem:[%s2 + $0x10] sm:$0xff]
      %v226 = vld [vmem:[%s2 + $0x18] sm:$0xff]
      %v227 = vld [vmem:[%s2 + $0x20] sm:$0xff]
      %v228 = vld [vmem:[%s2 + $0x28] sm:$0xff]
      %v229 = vld [vmem:[%s2 + $0x30] sm:$0xff]
      %v230 = vld [vmem:[%s2 + $0x38] sm:$0x3f]
      %232 = vset.pattern.permute.xlu0 0
      %233 = vperm.xlu0 %232, %v223
      %v234 = vpop.permute.xlu0 %233
      %237 = vset.pattern.permute.xlu0 0
      %238 = vperm.xlu0 %237, %v224
      %v239 = vpop.permute.xlu0 %238
      %242 = vset.pattern.permute.xlu0 0
      %243 = vperm.xlu0 %242, %v225
      %v244 = vpop.permute.xlu0 %243
      %247 = vset.pattern.permute.xlu0 0
      %248 = vperm.xlu0 %247, %v226
      %v249 = vpop.permute.xlu0 %248
      %252 = vset.pattern.permute.xlu0 0
      %253 = vperm.xlu0 %252, %v227
      %v254 = vpop.permute.xlu0 %253
      %257 = vset.pattern.permute.xlu0 0
      %258 = vperm.xlu0 %257, %v228
      %v259 = vpop.permute.xlu0 %258
      %262 = vset.pattern.permute.xlu0 0
      %263 = vperm.xlu0 %262, %v229
      %v264 = vpop.permute.xlu0 %263
      %267 = vset.pattern.permute.xlu0 0
      %268 = vperm.xlu0 %267, %v230
      %v269 = vpop.permute.xlu0 %268
      %v279 = vunpack.c.l.b16 %v203
      %v280 = vunpack.c.l.b16 %v204
      %v281 = vunpack.c.l.b16 %v205
      %v282 = vunpack.c.l.b16 %v206
      %v283 = vunpack.c.l.b16 %v207
      %v284 = vunpack.c.l.b16 %v208
      %v285 = vunpack.c.l.b16 %v209
      %v286 = vunpack.c.l.b16 %v210
      %v287 = vpack.c.b16 %v280, %v279
      %v288 = vpack.c.b16 %v282, %v281
      %v289 = vpack.c.b16 %v284, %v283
      %v290 = vpack.c.b16 %v286, %v285
      %v303 = vunpack.c.l.b16 %v211
      %v304 = vunpack.c.l.b16 %v212
      %v305 = vunpack.c.l.b16 %v213
      %v306 = vunpack.c.l.b16 %v214
      %v307 = vunpack.c.l.b16 %v215
      %v308 = vunpack.c.l.b16 %v216
      %v309 = vunpack.c.l.b16 %v217
      %v310 = vunpack.c.l.b16 %v218
      %v311 = vunpack.c.l.b16 %v219
      %v312 = vunpack.c.l.b16 %v220
      %v313 = vunpack.c.l.b16 %v221
      %v314 = vunpack.c.l.b16 %v222
      %v315 = vpack.c.b16 %v304, %v303
      %v316 = vpack.c.b16 %v306, %v305
      %v317 = vpack.c.b16 %v308, %v307
      %v318 = vpack.c.b16 %v310, %v309
      %v319 = vpack.c.b16 %v312, %v311
      %v320 = vpack.c.b16 %v314, %v313
      %vm327 = vcmask 785408
      %v329 = vsel %vm327, %v287, 0
      %v332 = vsel %vm327, %v288, 0
      %v335 = vsel %vm327, %v289, 0
      %v338 = vsel %vm327, %v290, 0
      %340 = vmatprep.subr.bf16.mxu0 0
      %341 = vmatpush1.bf16.msra.mxu0 %v315
      %342 = vmatprep.subr.bf16.mxu0 0
      %343 = vmatpush1.bf16.msra.mxu0 %v316
      %344 = vmatprep.subr.bf16.mxu0 0
      %345 = vmatpush1.bf16.msra.mxu0 %v317
      %346 = vmatprep.subr.bf16.mxu0 0
      %347 = vmatpush1.bf16.msra.mxu0 %v318
      %348 = vmatprep.subr.bf16.mxu0 0
      %349 = vmatpush1.bf16.msra.mxu0 %v319
      %350 = vmatprep.subr.bf16.mxu0 0
      %351 = vmatpush1.bf16.msra.mxu0 %v320
      %352 = vmatprep.subr.bf16.mxu0 0
      %353 = vmatpush1.bf16.msra.mxu0 0
      %354 = vmatprep.subr.bf16.mxu0 0
      %355 = vmatpush1.bf16.msra.mxu0 0
      %356 = vmatprep.subr.bf16.mxu0 0
      %357 = vmatpush1.bf16.msra.mxu0 0
      %358 = vmatprep.subr.bf16.mxu0 0
      %359 = vmatpush1.bf16.msra.mxu0 0
      %360 = vmatprep.subr.bf16.mxu0 0
      %361 = vmatpush1.bf16.msra.mxu0 0
      %362 = vmatprep.subr.bf16.mxu0 0
      %363 = vmatpush1.bf16.msra.mxu0 0
      %364 = vmatprep.subr.bf16.mxu0 0
      %365 = vmatpush1.bf16.msra.mxu0 0
      %366 = vmatprep.subr.bf16.mxu0 0
      %367 = vmatpush1.bf16.msra.mxu0 0
      %368 = vmatprep.subr.bf16.mxu0 0
      %369 = vmatpush1.bf16.msra.mxu0 0
      %370 = vmatprep.subr.bf16.mxu0 0
      %371 = vmatpush1.bf16.msra.mxu0 0
      %372 = vmatprep.mubr.bf16.mxu0 0
      %373 = vmatmul.mubr.bf16.gmra.mrb[0].mxu0 %v329
      %v374 = vpop.f32.mrb[0].mxu0
      %v375 = vadd.f32 %v234, %v374
      %v376 = vpop.f32.mrb[0].mxu0
      %v377 = vpop.f32.mrb[0].mxu0
      %v378 = vadd.f32 %v239, %v377
      %v379 = vpop.f32.mrb[0].mxu0
      %380 = vmatprep.mubr.bf16.mxu0 0
      %381 = vmatmul.mubr.bf16.gmra.mrb[0].mxu0 %v332
      %v382 = vpop.f32.mrb[0].mxu0
      %v383 = vadd.f32 %v244, %v382
      %v384 = vpop.f32.mrb[0].mxu0
      %v385 = vpop.f32.mrb[0].mxu0
      %v386 = vadd.f32 %v249, %v385
      %v387 = vpop.f32.mrb[0].mxu0
      %388 = vmatprep.mubr.bf16.mxu0 0
      %389 = vmatmul.mubr.bf16.gmra.mrb[0].mxu0 %v335
      %v390 = vpop.f32.mrb[0].mxu0
      %v391 = vadd.f32 %v254, %v390
      %v392 = vpop.f32.mrb[0].mxu0
      %v393 = vpop.f32.mrb[0].mxu0
      %v394 = vadd.f32 %v259, %v393
      %v395 = vpop.f32.mrb[0].mxu0
      %396 = vmatprep.mubr.bf16.mxu0 0
      %397 = vmatmul.mubr.bf16.gmra.mrb[0].mxu0 %v338
      %v398 = vpop.f32.mrb[0].mxu0
      %v399 = vadd.f32 %v264, %v398
      %v400 = vpop.f32.mrb[0].mxu0
      %v401 = vpop.f32.mrb[0].mxu0
      %v402 = vadd.f32 %v269, %v401
      %v403 = vpop.f32.mrb[0].mxu0
      %404 = vdwg.mxu0
      %v405 = vmax.f32 %v375, 0.6327
      %v406 = vmax.f32 %v378, 0.6327
      %v407 = vmax.f32 %v383, 0.6327
      %v408 = vmax.f32 %v386, 0.6327
      %v409 = vmax.f32 %v391, 0.6327
      %v410 = vmax.f32 %v394, 0.6327
      %v411 = vmax.f32 %v399, 0.6327
      %v412 = vmax.f32 %v402, 0.6327
      %v413 = vmin.f32 %v405, 0.7688
      %v414 = vmin.f32 %v406, 0.7688
      %v415 = vmin.f32 %v407, 0.7688
      %v416 = vmin.f32 %v408, 0.7688
      %v417 = vmin.f32 %v409, 0.7688
      %v418 = vmin.f32 %v410, 0.7688
      %v419 = vmin.f32 %v411, 0.7688
      %v420 = vmin.f32 %v412, 0.7688
      %vm421 = vcmask 400384
      %422 = vst.msk [vmem:[%s201] sm:$0xff] %vm421, %v413
      %423 = vst.msk [vmem:[%s201 + $0x8] sm:$0xff] %vm421, %v414
      %424 = vst.msk [vmem:[%s201 + $0x10] sm:$0xff] %vm421, %v415
      %425 = vst.msk [vmem:[%s201 + $0x18] sm:$0xff] %vm421, %v416
      %426 = vst.msk [vmem:[%s201 + $0x20] sm:$0xff] %vm421, %v417
      %427 = vst.msk [vmem:[%s201 + $0x28] sm:$0xff] %vm421, %v418
      %428 = vst.msk [vmem:[%s201 + $0x30] sm:$0xff] %vm421, %v419
      %vm429 = vcmask 398336
      %430 = vst.msk [vmem:[%s201 + $0x38] sm:$0x3f] %vm429, %v420
      %p431 = scmp.lt.s32.totalorder %s18, 1
      %s432 = scalar_select %p431, %s18, 1
      %p433 = scmp.lt.s32.totalorder %s19, 0
      %s434 = scalar_select %p433, %s19, 0
      %s435 = smul.addr %s432, 8
      %s436 = sadd.s32 %s434, %s435
      %s437 = smul.addr %s436, 8
      %s438 = scalar_lea.vmem %s3, %s437
      // Predicated region
      $region33: #{conv_clamp.1} parent=31 // pred_check
        %p439 = pneg %p116
      $region34: #{conv_clamp.1} parent=31 // pred_check_branch
        %441 = sbr.rel (%p439) target = $region36
      $region35: #{conv_clamp.1} parent=31 // pred_region
        _
      $region36: #{conv_clamp.1} parent=31 // pred_fallthru
        _
    $region32: #{conv_clamp.1} parent=5 // pred_fallthru
      _
    %p442 = scmp.le.s32.totalorder 2, %s9
    // Predicated region
    $region37: #{conv_clamp.1} parent=5 // pred_check
      %p443 = pneg %p442
    $region38: #{conv_clamp.1} parent=5 // pred_check_branch
      %445 = sbr.rel (%p443) target = $region40
    $region39: #{conv_clamp.1} parent=5 // pred_region
      %s446 = ssub.s32 %s9, 2
      // Predicated region
      $region41: #{conv_clamp.1} parent=39 // pred_check
        %p447 = pneg %p122
      $region42: #{conv_clamp.1} parent=39 // pred_check_branch
        %449 = sbr.rel (%p447) target = $region44
      $region43: #{conv_clamp.1} parent=39 // pred_region
        %p450 = scmp.lt.s32.totalorder %s20, 1
        %s451 = scalar_select %p450, %s20, 1
        %p452 = scmp.lt.s32.totalorder %s21, 0
        %s453 = scalar_select %p452, %s21, 0
        %s454 = smul.addr %s451, 8
        %s455 = sadd.s32 %s453, %s454
        %s456 = smul.addr %s455, 8
        %s457 = scalar_lea.vmem %s3, %s456
      $region44: #{conv_clamp.1} parent=39 // pred_fallthru
        _
    $region40: #{conv_clamp.1} parent=5 // pred_fallthru
      _
  $region6: #{conv_clamp.1} parent=0 // loop_footer
    %s13 = sadd.s32 1, %s9
  $region7: #{conv_clamp.1} parent=0 // loop_footer_branch
    %8 = sbr.rel target = $region3
  $region8: #{conv_clamp.1} parent=0 // loop_exit
    _

</llo_original>
